<compile_context>
chip_gen: v5e
topology: v5e:2x2
jax: 0.10.0
libtpu: 0.0.40
codegen_flags: <defaults>
</compile_context>

<pallas_src>
import functools

import jax
import jax.numpy as jnp
from jax.experimental import pallas as pl
from jax.experimental.pallas import tpu as pltpu


def _value_head_kernel(x_ref, w_ref, b_ref, o_ref):
    # x_ref: (tm, D) VMEM   w_ref: (D, 1) VMEM   b_ref: (1,) SMEM   o_ref: (tm, 1) VMEM
    acc = jnp.dot(x_ref[...], w_ref[...], preferred_element_type=jnp.float32)
    o_ref[...] = (acc + b_ref[0]).astype(o_ref.dtype)


def _round_up(x, m):
    return (x + m - 1) // m * m


@functools.partial(jax.jit, static_argnames=("tm", "target_block_bytes"))
def value_head(x, weight, bias, *, tm=None, target_block_bytes=8 * 1024 * 1024):
    """x: (B, S, D), weight: (D, 1), bias: (1,) -> (B, S, 1)."""
    B, S, D = x.shape
    N = B * S
    x2d = x.reshape(N, D)

    # --- choose a bandwidth-friendly row tile ---------------------------------
    bytes_per_row = D * x.dtype.itemsize
    if tm is None:
        tm = target_block_bytes // max(bytes_per_row, 1)
        tm = max(8, (tm // 8) * 8)           # sublane-aligned
    # never tile beyond the (sublane-padded) row count
    tm = min(tm, _round_up(N, 8))
    tm = max(8, (tm // 8) * 8)

    # --- ragged tail: pad rows up to a multiple of tm -------------------------
    N_pad = _round_up(N, tm)
    if N_pad != N:
        x2d = jnp.pad(x2d, ((0, N_pad - N), (0, 0)))
    grid = (N_pad // tm,)

    # --- VMEM budget: double-buffered x tile + weight + output + headroom -----
    needed = (2 * tm * bytes_per_row                      # x tiles (double buffered)
              + 2 * D * weight.dtype.itemsize             # weight
              + 2 * tm * x.dtype.itemsize)                # output tiles
    vmem_limit = int(max(needed + (4 << 20), 32 << 20))   # >= 32 MiB, < 64 MiB for 8 MiB tiles

    bias1 = bias.reshape((1,)).astype(jnp.float32)

    out = pl.pallas_call(
        _value_head_kernel,
        out_shape=jax.ShapeDtypeStruct((N_pad, 1), x.dtype),
        grid_spec=pltpu.PrefetchScalarGridSpec(
            num_scalar_prefetch=0,
            grid=grid,
            in_specs=[
                pl.BlockSpec((tm, D), lambda i: (i, 0)),                 # x tile
                pl.BlockSpec((D, 1), lambda i: (0, 0)),                  # full weight
                pl.BlockSpec(memory_space=pltpu.MemorySpace.SMEM),       # scalar bias
            ],
            out_specs=pl.BlockSpec((tm, 1), lambda i: (i, 0)),
        ),
        compiler_params=pltpu.CompilerParams(
            dimension_semantics=("parallel",),
            vmem_limit_bytes=vmem_limit,
        ),
    )(x2d, weight, bias1)

    return out[:N].reshape(B, S, 1)


if __name__ == "__main__":
    key = jax.random.PRNGKey(0)
    kx, kw, kb, kx2 = jax.random.split(key, 4)

    # Small shapes consistent with the module: batch=2, seq=8, d_model=32.
    B, S, D = 2, 8, 32
    x = jax.random.normal(kx, (B, S, D), dtype=jnp.float32)

    # nn.Linear(d_model, 1): PyTorch weight is (1, d_model); stored transposed.
    bound = 1.0 / (D ** 0.5)
    weight = jax.random.uniform(kw, (D, 1), jnp.float32, -bound, bound)
    bias = jax.random.uniform(kb, (1,), jnp.float32, -bound, bound)

    y = jax.block_until_ready(value_head(x, weight, bias))
    y_ref = (x.reshape(-1, D) @ weight + bias).reshape(B, S, 1)
    assert y.shape == (B, S, 1)
    assert jnp.allclose(y, y_ref, atol=1e-5, rtol=1e-5)

    # Ragged row count (B*S not a multiple of the tile) exercises the padding path.
    B2, S2 = 3, 5
    x2 = jax.random.normal(kx2, (B2, S2, D), dtype=jnp.float32)
    y2 = jax.block_until_ready(value_head(x2, weight, bias))
    y2_ref = (x2.reshape(-1, D) @ weight + bias).reshape(B2, S2, 1)
    assert y2.shape == (B2, S2, 1)
    assert jnp.allclose(y2, y2_ref, atol=1e-5, rtol=1e-5)

    print("KERNEL_OK")
</pallas_src>

<mosaic_0001>
module attributes {stable_mosaic.version = 11 : i64} {
  func.func @_value_head_kernel(%arg0: i32, %arg1: memref<16x32xf32, #tpu.memory_space<vmem>>, %arg2: memref<32x1xf32, #tpu.memory_space<vmem>>, %arg3: memref<1xf32, #tpu.memory_space<smem>>, %arg4: memref<16x1xf32, #tpu.memory_space<vmem>>) attributes {dimension_semantics = [#tpu.dimension_semantics<parallel>], iteration_bounds = array<i64: 1>, scalar_prefetch = 0 : i64, scratch_operands = 0 : i64, tpu.core_type = #tpu.core_type<tc>, window_params = [{transform_indices = @transform_0, window_bounds = array<i64: 16, 32>}, {pipeline_mode = #tpu.pipeline_mode<synchronous>, transform_indices = @transform_1, window_bounds = array<i64: 32, 1>}, {transform_indices = @transform_2, window_bounds = array<i64: 1>}, {transform_indices = @transform_3, window_bounds = array<i64: 16, 1>}]} {
    %c0 = arith.constant 0 : index
    %c0_0 = arith.constant 0 : index
    %0 = vector.load %arg1[%c0, %c0_0] : memref<16x32xf32, #tpu.memory_space<vmem>>, vector<16x32xf32>
    %c0_1 = arith.constant 0 : index
    %c0_2 = arith.constant 0 : index
    %1 = vector.load %arg2[%c0_1, %c0_2] : memref<32x1xf32, #tpu.memory_space<vmem>>, vector<32x1xf32>
    %cst = arith.constant dense<0.000000e+00> : vector<16x1xf32>
    %2 = tpu.matmul %0, %1, %cst {dimension_numbers = #tpu.dot_dimension_numbers<[1], [0], [0], [1], [0, 0, 1, 1], [], []>} : vector<16x32xf32>, vector<32x1xf32>, vector<16x1xf32> -> vector<16x1xf32>
    %c0_3 = arith.constant 0 : index
    %3 = memref.load %arg3[%c0_3] : memref<1xf32, #tpu.memory_space<smem>>
    %4 = vector.broadcast %3 : f32 to vector<16x1xf32>
    %5 = arith.addf %2, %4 : vector<16x1xf32>
    %c0_4 = arith.constant 0 : index
    %c0_5 = arith.constant 0 : index
    %6 = vector.load %arg4[%c0_4, %c0_5] : memref<16x1xf32, #tpu.memory_space<vmem>>, vector<16x1xf32>
    tpu.vector_store %arg4[%c0_4, %c0_5], %5 {strides = array<i32>} : memref<16x1xf32, #tpu.memory_space<vmem>>, vector<16x1xf32>,
    return
  }
  func.func @transform_0(%arg0: i32) -> (i32, i32) {
    %c0_i32 = arith.constant 0 : i32
    %c0_i32_0 = arith.constant 0 : i32
    return %arg0, %c0_i32 : i32, i32
  }
  func.func @transform_1(%arg0: i32) -> (i32, i32) {
    %c0_i32 = arith.constant 0 : i32
    %c0_i32_0 = arith.constant 0 : i32
    %c0_i32_1 = arith.constant 0 : i32
    return %c0_i32, %c0_i32_0 : i32, i32
  }
  func.func @transform_2(%arg0: i32) -> i32 {
    %c0_i32 = arith.constant 0 : i32
    %c0_i32_0 = arith.constant 0 : i32
    return %c0_i32 : i32
  }
  func.func @transform_3(%arg0: i32) -> (i32, i32) {
    %c0_i32 = arith.constant 0 : i32
    %c0_i32_0 = arith.constant 0 : i32
    return %arg0, %c0_i32 : i32, i32
  }
}

</mosaic_0001>

<llo_original>
// kernel: value_head.1
$region0: #{value_head.1}
  #allocation0 [shape = 'u32[]', space=smem, size = 0x4, offset = 0x4, fixed_abs, tag = 'smem constant byte address 0x4 - core index']
  #allocation1 [shape = 'u32[72,128]{1,0:T(1,128)}', space=vmem, size = 0x9000, scoped, tag = 'internal scratch']
  #allocation2 [shape = 'f32[1]{0:T(128)S(6)}', space=smem, size = 0x200, scoped, tag = 'scoped memory for value_head.1']
  %s0 = inlined_call_operand.vmem [shape: f32[16,32], index: 0, kind: input, shape index: {}]
  %s1 = inlined_call_operand.vmem [shape: f32[32,1], index: 1, kind: input, shape index: {}]
  %s2 = inlined_call_operand.<no memory space> [shape: f32[1], index: 2, kind: input, shape index: {}]
  %s3 = inlined_call_operand.vmem [shape: f32[16,1], index: 3, kind: output, shape index: {}]
  %s4 = sld [smem:[#allocation0]]
  $region22: #{value_head.1} parent=0
    _
  %s6 = ssub.s32 1, %s4
  %s7 = scalar_select 0, %s6, %s4
  %8 = sst [smem:[#allocation2]] %s2
  // Predicated region
  $region2: #{value_head.1} parent=0 // pred_check
    _
  $region3: #{value_head.1} parent=0 // pred_check_branch
    %10 = sbr.rel (0) target = $region5
  $region4: #{value_head.1} parent=0 // pred_region
    _
  $region5: #{value_head.1} parent=0 // pred_fallthru
    _
  // Predicated region
  $region6: #{value_head.1} parent=0 // pred_check
    _
  $region7: #{value_head.1} parent=0 // pred_check_branch
    %12 = sbr.rel (0) target = $region9
  $region8: #{value_head.1} parent=0 // pred_region
    _
  $region9: #{value_head.1} parent=0 // pred_fallthru
    _
  // Predicated region
  $region10: #{value_head.1} parent=0 // pred_check
    _
  $region11: #{value_head.1} parent=0 // pred_check_branch
    %14 = sbr.rel (0) target = $region13
  $region12: #{value_head.1} parent=0 // pred_region
    _
  $region13: #{value_head.1} parent=0 // pred_fallthru
    _
  %v15 = vld [vmem:[%s0] sm:$0xff]
  %v16 = vld [vmem:[%s0 + $0x8] sm:$0xff]
  %v17 = vld [vmem:[%s1] sm:$0xff]
  %v18 = vld [vmem:[%s1 + $0x8] sm:$0xff]
  %v19 = vld [vmem:[%s1 + $0x10] sm:$0xff]
  %v20 = vld [vmem:[%s1 + $0x18] sm:$0xff]
  %s21 = sld [smem:[#allocation2]]
  %v22 = vstv %s21
  %vm23 = vcmask 261120
  %v25 = vsel %vm23, %v15, 0
  %v28 = vsel %vm23, %v16, 0
  %30 = vmatpush.msra.mxu0 0.0
  %31 = vmatpush.msra.mxu0 0.0
  %32 = vmatpush.msra.mxu0 0.0
  %33 = vmatpush.msra.mxu0 0.0
  %34 = vmatpush.msra.mxu0 0.0
  %35 = vmatpush.msra.mxu0 0.0
  %36 = vmatpush.msra.mxu0 0.0
  %37 = vmatpush.msra.mxu0 0.0
  %38 = vmatpush.msra.mxu0 0.0
  %39 = vmatpush.msra.mxu0 0.0
  %40 = vmatpush.msra.mxu0 0.0
  %41 = vmatpush.msra.mxu0 0.0
  %42 = vmatpush.msra.mxu0 %v20
  %43 = vmatpush.msra.mxu0 %v19
  %44 = vmatpush.msra.mxu0 %v18
  %45 = vmatpush.msra.mxu0 %v17
  %46 = vmatmul.f32.gmra.mxu0 %v25
  %v47 = vpop.f32.mrf.mxu0
  %v48 = vadd.f32 %v22, %v47
  %49 = vmatmul.f32.gmra.mxu0 %v28
  %v50 = vpop.f32.mrf.mxu0
  %v51 = vadd.f32 %v22, %v50
  %52 = vdwg.mxu0
  %vm53 = vcmask 7168
  %54 = vst.msk [vmem:[%s3] sm:$0xff] %vm53, %v48
  %55 = vst.msk [vmem:[%s3 + $0x8] sm:$0xff] %vm53, %v51
  // Predicated region
  $region14: #{value_head.1} parent=0 // pred_check
    _
  $region15: #{value_head.1} parent=0 // pred_check_branch
    %57 = sbr.rel (0) target = $region17
  $region16: #{value_head.1} parent=0 // pred_region
    _
  $region17: #{value_head.1} parent=0 // pred_fallthru
    _
  // Predicated region
  $region18: #{value_head.1} parent=0 // pred_check
    _
  $region19: #{value_head.1} parent=0 // pred_check_branch
    %59 = sbr.rel (0) target = $region21
  $region20: #{value_head.1} parent=0 // pred_region
    _
  $region21: #{value_head.1} parent=0 // pred_fallthru
    _

</llo_original>
